<compile_context>
chip_gen: v7x
topology: tpu7x:2x2x1
jax: 0.10.0
libtpu: 0.0.40
codegen_flags: <defaults>
</compile_context>

<pallas_src>
import jax
import jax.numpy as jnp
from jax.experimental import pallas as pl
from jax.experimental.pallas import tpu as pltpu


def _sse_kernel(x_ref, w_ref, b_ref, o_ref):
    """x_ref: (1, C, T) VMEM; w_ref: (C, 1) VMEM; b_ref: (1,) SMEM; o_ref like x_ref."""
    x = x_ref[0].astype(jnp.float32)                            # (C, T)
    w = w_ref[...].astype(jnp.float32)                          # (C, 1) -> lane broadcast
    logits = jnp.sum(x * w, axis=0, keepdims=True) + b_ref[0]   # (1, T) 1x1 conv
    attn = jax.nn.sigmoid(logits)                               # EUP transcendentals
    o_ref[0] = (x * attn).astype(o_ref.dtype)                   # channel-broadcast scale


def _spatial_tile(hw, cap=2048):
    """Largest multiple-of-128 divisor of hw up to `cap` (else the full extent)."""
    if hw % 128 != 0:
        return hw          # full-extent last dim is always a legal block
    t = min(hw, cap)
    t -= t % 128
    while hw % t != 0:
        t -= 128
    return t


@jax.jit
def sse_block(x, w, b):
    """sSEBlock forward.  x: (N, C, H, W) NCHW, w: (1, C, 1, 1), b: (1,)."""
    N, C, H, W = x.shape
    HW = H * W
    T = _spatial_tile(HW)
    grid = (N, HW // T)

    # Channel reduction needs all C per block; spatial axis is tiled on lanes.
    x_flat = x.reshape(N, C, HW)
    w_col = w.reshape(C, 1).astype(jnp.float32)
    b_s = b.reshape(1).astype(jnp.float32)

    out = pl.pallas_call(
        _sse_kernel,
        out_shape=jax.ShapeDtypeStruct((N, C, HW), x.dtype),
        grid=grid,
        in_specs=[
            pl.BlockSpec((1, C, T), lambda n, t: (n, 0, t)),                 # x tile
            pl.BlockSpec((C, 1), lambda n, t: (0, 0)),                       # weight
            pl.BlockSpec(memory_space=pltpu.MemorySpace.SMEM),               # bias scalar
        ],
        out_specs=pl.BlockSpec((1, C, T), lambda n, t: (n, 0, t)),
        compiler_params=pltpu.CompilerParams(
            dimension_semantics=("parallel", "parallel")),
    )(x_flat, w_col, b_s)
    return out.reshape(N, C, H, W)


def _reference(x, w, b):
    """Pure-JAX reference of the PyTorch sSEBlock forward."""
    logits = jnp.einsum("nchw,c->nhw", x.astype(jnp.float32),
                        w.reshape(-1).astype(jnp.float32)) + b.astype(jnp.float32)[0]
    attn = jax.nn.sigmoid(logits)[:, None, :, :]
    return (attn * x.astype(jnp.float32)).astype(x.dtype)


if __name__ == "__main__":
    N, C, H, W = 2, 4, 16, 16
    key = jax.random.PRNGKey(0)
    kx, kw, kb = jax.random.split(key, 3)
    x = jax.random.normal(kx, (N, C, H, W), jnp.float32)
    w = jax.random.normal(kw, (1, C, 1, 1), jnp.float32) / jnp.sqrt(C)
    b = 0.01 * jax.random.normal(kb, (1,), jnp.float32)

    out = jax.block_until_ready(sse_block(x, w, b))
    ref = _reference(x, w, b)

    assert out.shape == (N, C, H, W)
    assert bool(jnp.all(jnp.isfinite(out)))
    assert bool(jnp.allclose(out, ref, atol=1e-5, rtol=1e-5))
    print("KERNEL_OK")
</pallas_src>

<mosaic_0001>
module attributes {stable_mosaic.version = 11 : i64} {
  func.func @_sse_kernel(%arg0: i32, %arg1: i32, %arg2: memref<1x4x256xf32, #tpu.memory_space<vmem>>, %arg3: memref<4x1xf32, #tpu.memory_space<vmem>>, %arg4: memref<1xf32, #tpu.memory_space<smem>>, %arg5: memref<1x4x256xf32, #tpu.memory_space<vmem>>) attributes {dimension_semantics = [#tpu.dimension_semantics<parallel>, #tpu.dimension_semantics<parallel>], iteration_bounds = array<i64: 2, 1>, scalar_prefetch = 0 : i64, scratch_operands = 0 : i64, tpu.core_type = #tpu.core_type<tc>, window_params = [{transform_indices = @transform_0, window_bounds = array<i64: 1, 4, 256>}, {pipeline_mode = #tpu.pipeline_mode<synchronous>, transform_indices = @transform_1, window_bounds = array<i64: 4, 1>}, {transform_indices = @transform_2, window_bounds = array<i64: 1>}, {transform_indices = @transform_3, window_bounds = array<i64: 1, 4, 256>}]} {
    %c0 = arith.constant 0 : index
    %c0_0 = arith.constant 0 : index
    %c0_1 = arith.constant 0 : index
    %0 = vector.load %arg2[%c0, %c0_0, %c0_1] : memref<1x4x256xf32, #tpu.memory_space<vmem>>, vector<1x4x256xf32>
    %1 = vector.shape_cast %0 : vector<1x4x256xf32> to vector<4x256xf32>
    %c0_2 = arith.constant 0 : index
    %c0_3 = arith.constant 0 : index
    %2 = vector.load %arg3[%c0_2, %c0_3] : memref<4x1xf32, #tpu.memory_space<vmem>>, vector<4x1xf32>
    %3 = vector.broadcast %2 : vector<4x1xf32> to vector<4x256xf32>
    %4 = arith.mulf %1, %3 : vector<4x256xf32>
    %cst = arith.constant dense<0.000000e+00> : vector<256xf32>
    %5 = vector.multi_reduction <add>, %4, %cst [0] : vector<4x256xf32> to vector<256xf32>
    %6 = vector.shape_cast %5 : vector<256xf32> to vector<1x256xf32>
    %c0_4 = arith.constant 0 : index
    %7 = memref.load %arg4[%c0_4] : memref<1xf32, #tpu.memory_space<smem>>
    %8 = vector.broadcast %7 : f32 to vector<1x256xf32>
    %9 = arith.addf %6, %8 : vector<1x256xf32>
    %10 = arith.negf %9 : vector<1x256xf32>
    %11 = math.exp %10 : vector<1x256xf32>
    %cst_5 = arith.constant 1.000000e+00 : f32
    %12 = vector.broadcast %cst_5 : f32 to vector<1x256xf32>
    %13 = arith.addf %12, %11 : vector<1x256xf32>
    %14 = arith.divf %12, %13 : vector<1x256xf32>
    %15 = vector.broadcast %14 : vector<1x256xf32> to vector<4x256xf32>
    %16 = arith.mulf %1, %15 : vector<4x256xf32>
    %c0_6 = arith.constant 0 : index
    %c0_7 = arith.constant 0 : index
    %c0_8 = arith.constant 0 : index
    %17 = vector.load %arg5[%c0_6, %c0_7, %c0_8] : memref<1x4x256xf32, #tpu.memory_space<vmem>>, vector<1x4x256xf32>
    %18 = vector.shape_cast %17 : vector<1x4x256xf32> to vector<4x256xf32>
    %19 = vector.shape_cast %16 : vector<4x256xf32> to vector<1x4x256xf32>
    tpu.vector_store %arg5[%c0_6, %c0_7, %c0_8], %19 {strides = array<i32>} : memref<1x4x256xf32, #tpu.memory_space<vmem>>, vector<1x4x256xf32>,
    return
  }
  func.func @transform_0(%arg0: i32, %arg1: i32) -> (i32, i32, i32) {
    %c0_i32 = arith.constant 0 : i32
    %c0_i32_0 = arith.constant 0 : i32
    return %arg0, %c0_i32, %arg1 : i32, i32, i32
  }
  func.func @transform_1(%arg0: i32, %arg1: i32) -> (i32, i32) {
    %c0_i32 = arith.constant 0 : i32
    %c0_i32_0 = arith.constant 0 : i32
    %c0_i32_1 = arith.constant 0 : i32
    return %c0_i32, %c0_i32_0 : i32, i32
  }
  func.func @transform_2(%arg0: i32, %arg1: i32) -> i32 {
    %c0_i32 = arith.constant 0 : i32
    %c0_i32_0 = arith.constant 0 : i32
    return %c0_i32 : i32
  }
  func.func @transform_3(%arg0: i32, %arg1: i32) -> (i32, i32, i32) {
    %c0_i32 = arith.constant 0 : i32
    %c0_i32_0 = arith.constant 0 : i32
    return %arg0, %c0_i32, %arg1 : i32, i32, i32
  }
}

</mosaic_0001>

<llo_original>
// kernel: sse_block.1
$region0: #{sse_block.1}
  #allocation0 [shape = 'u32[]', space=smem, size = 0x4, offset = 0x4, fixed_abs, tag = 'smem constant byte address 0x4 - core index']
  #allocation1 [shape = 'u32[144,128]{1,0:T(1,128)}', space=vmem, size = 0x12000, scoped, tag = 'internal scratch']
  #allocation2 [shape = 'f32[1]{0:T(128)S(6)}', space=smem, size = 0x200, scoped, tag = 'scoped memory for sse_block.1']
  %s0 = inlined_call_operand.vmem [shape: f32[2,4,256], index: 0, kind: input, shape index: {}]
  %s1 = inlined_call_operand.vmem [shape: f32[4,1], index: 1, kind: input, shape index: {}]
  %s2 = inlined_call_operand.<no memory space> [shape: f32[1], index: 2, kind: input, shape index: {}]
  %s3 = inlined_call_operand.vmem [shape: f32[2,4,256], index: 3, kind: output, shape index: {}]
  %s4 = sld [smem:[#allocation0]]
  $region45: #{sse_block.1} parent=0
    _
  %s6 = ssub.s32 1, %s4
  %s7 = scalar_select 0, %s6, %s4
  %8 = sst [smem:[#allocation2]] %s2
  loop: start=0, step=1, limit=4
  $region2: #{sse_block.1} parent=0 // loop_pre_header
    _
  $region3: #{sse_block.1} parent=0 // loop_header
    %s10 = sphi 0, %s14
    %p11 = scmp.ge.s32.totalorder %s10, 4
    %s17 = sphi 0, %s29
    %s18 = sphi 0, %s25
    %s19 = sphi 0, %s17
    %s20 = sphi 0, %s18
    %s21 = sphi 0, %s19
    %s22 = sphi 0, %s20
    %s34 = sphi 0, %s36
    %s37 = sphi 0, %s34
    %s38 = sphi 0, %s37
    %s54 = sphi 0, %s38
    %s58 = sphi 0, %s58
    %s60 = sphi 0, %s58
    %s61 = sphi 0, %s60
    %s75 = sphi 0, %s61
    %s79 = sphi 0, %s79
    %s81 = sphi 0, %s79
    %s82 = sphi 0, %s81
    %s96 = sphi 0, %s82
    %s104 = sphi 0, %s106
    %s107 = sphi 0, %s104
    %s108 = sphi 0, %s107
    %s124 = sphi 0, %s108
  $region4: #{sse_block.1} parent=0 // loop_header_branch
    %13 = sbr.rel (%p11) target = $region8
  $region5: #{sse_block.1} parent=0 // loop_body
    %s15 = ssub.s32 %s10, 1
    %s16 = ssub.s32 %s10, 2
    %s23 = sadd.s32 1, %s18
    %p24 = scmp.ge.s32.totalorder %s23, 1
    %s25 = scalar_select %p24, 0, %s23
    %s26 = sadd.s32 1, %s17
    %s27 = scalar_select %p24, %s26, %s17
    %p28 = scmp.ge.s32.totalorder %s27, 2
    %s29 = scalar_select %p28, 0, %s27
    %s30 = ssub.s32 %s17, %s29
    %s31 = ssub.s32 %s18, %s25
    %s32 = sor.u32 %s30, %s31
    %p33 = scmp.eq.s32.totalorder %s32, 0
    %s35 = sadd.s32 %s34, 1
    %s36 = scalar_select %p33, %s34, %s35
    %p39 = pneg %p33
    %p40 = scmp.eq.s32.totalorder %s10, 1
    %p41 = por %p39, %p40
    %p42 = scmp.ne.s32.totalorder %s34, %s37
    %p43 = scmp.eq.s32.totalorder %s10, 0
    %p44 = por %p42, %p43
    %p45 = scmp.ne.s32.totalorder %s34, %s37
    %p46 = scmp.eq.s32.totalorder %s15, 1
    %p47 = por %p45, %p46
    %p48 = scmp.ne.s32.totalorder %s37, %s38
    %p49 = scmp.eq.s32.totalorder %s15, 0
    %p50 = por %p48, %p49
    %p51 = scmp.ne.s32.totalorder %s37, %s38
    %p52 = scmp.eq.s32.totalorder %s16, 1
    %p53 = por %p51, %p52
    %p55 = scmp.ne.s32.totalorder %s38, %s54
    %p56 = scmp.eq.s32.totalorder %s16, 0
    %p57 = por %p55, %p56
    %s59 = sadd.s32 %s58, 1
    %p62 = scmp.eq.s32.totalorder %s10, 1
    %p63 = scmp.ne.s32.totalorder %s58, %s60
    %p64 = scmp.eq.s32.totalorder %s10, 0
    %p65 = por %p63, %p64
    %p66 = scmp.ne.s32.totalorder %s58, %s60
    %p67 = scmp.eq.s32.totalorder %s15, 1
    %p68 = por %p66, %p67
    %p69 = scmp.ne.s32.totalorder %s60, %s61
    %p70 = scmp.eq.s32.totalorder %s15, 0
    %p71 = por %p69, %p70
    %p72 = scmp.ne.s32.totalorder %s60, %s61
    %p73 = scmp.eq.s32.totalorder %s16, 1
    %p74 = por %p72, %p73
    %p76 = scmp.ne.s32.totalorder %s61, %s75
    %p77 = scmp.eq.s32.totalorder %s16, 0
    %p78 = por %p76, %p77
    %s80 = sadd.s32 %s79, 1
    %p83 = scmp.eq.s32.totalorder %s10, 1
    %p84 = scmp.ne.s32.totalorder %s79, %s81
    %p85 = scmp.eq.s32.totalorder %s10, 0
    %p86 = por %p84, %p85
    %p87 = scmp.ne.s32.totalorder %s79, %s81
    %p88 = scmp.eq.s32.totalorder %s15, 1
    %p89 = por %p87, %p88
    %p90 = scmp.ne.s32.totalorder %s81, %s82
    %p91 = scmp.eq.s32.totalorder %s15, 0
    %p92 = por %p90, %p91
    %p93 = scmp.ne.s32.totalorder %s81, %s82
    %p94 = scmp.eq.s32.totalorder %s16, 1
    %p95 = por %p93, %p94
    %p97 = scmp.ne.s32.totalorder %s82, %s96
    %p98 = scmp.eq.s32.totalorder %s16, 0
    %p99 = por %p97, %p98
    %s100 = ssub.s32 %s17, %s29
    %s101 = ssub.s32 %s18, %s25
    %s102 = sor.u32 %s100, %s101
    %p103 = scmp.eq.s32.totalorder %s102, 0
    %s105 = sadd.s32 %s104, 1
    %s106 = scalar_select %p103, %s104, %s105
    %p109 = pneg %p103
    %p110 = scmp.eq.s32.totalorder %s10, 1
    %p111 = por %p109, %p110
    %p112 = scmp.ne.s32.totalorder %s104, %s107
    %p113 = scmp.eq.s32.totalorder %s10, 0
    %p114 = por %p112, %p113
    %p115 = scmp.ne.s32.totalorder %s104, %s107
    %p116 = scmp.eq.s32.totalorder %s15, 1
    %p117 = por %p115, %p116
    %p118 = scmp.ne.s32.totalorder %s107, %s108
    %p119 = scmp.eq.s32.totalorder %s15, 0
    %p120 = por %p118, %p119
    %p121 = scmp.ne.s32.totalorder %s107, %s108
    %p122 = scmp.eq.s32.totalorder %s16, 1
    %p123 = por %p121, %p122
    %p125 = scmp.ne.s32.totalorder %s108, %s124
    %p126 = scmp.eq.s32.totalorder %s16, 0
    %p127 = por %p125, %p126
    %p128 = scmp.le.s32.totalorder 1, %s10
    %p129 = scmp.lt.s32.totalorder %s10, 3
    %p130 = pnand %p128, %p129
    %p131 = pneg %p130
    // Predicated region
    $region9: #{sse_block.1} parent=5 // pred_check
      _
    $region10: #{sse_block.1} parent=5 // pred_check_branch
      %133 = sbr.rel (%p130) target = $region12
    $region11: #{sse_block.1} parent=5 // pred_region
      %s134 = ssub.s32 %s10, 1
      // Predicated region
      $region13: #{sse_block.1} parent=11 // pred_check
        %p135 = pneg %p71
      $region14: #{sse_block.1} parent=11 // pred_check_branch
        %137 = sbr.rel (%p135) target = $region16
      $region15: #{sse_block.1} parent=11 // pred_region
        _
      $region16: #{sse_block.1} parent=11 // pred_fallthru
        _
      // Predicated region
      $region17: #{sse_block.1} parent=11 // pred_check
        %p138 = pneg %p92
      $region18: #{sse_block.1} parent=11 // pred_check_branch
        %140 = sbr.rel (%p138) target = $region20
      $region19: #{sse_block.1} parent=11 // pred_region
        _
      $region20: #{sse_block.1} parent=11 // pred_fallthru
        _
    $region12: #{sse_block.1} parent=5 // pred_fallthru
      _
    %p141 = scmp.lt.s32.totalorder %s10, 2
    // Predicated region
    $region21: #{sse_block.1} parent=5 // pred_check
      %p142 = pneg %p141
    $region22: #{sse_block.1} parent=5 // pred_check_branch
      %144 = sbr.rel (%p142) target = $region24
    $region23: #{sse_block.1} parent=5 // pred_region
      // Predicated region
      $region25: #{sse_block.1} parent=23 // pred_check
        %p145 = pneg %p44
      $region26: #{sse_block.1} parent=23 // pred_check_branch
        %147 = sbr.rel (%p145) target = $region28
      $region27: #{sse_block.1} parent=23 // pred_region
        %s148 = smul.u32 2, %s18
        %p149 = scmp.lt.s32.totalorder %s17, 1
        %s150 = scalar_select %p149, %s17, 1
        %p151 = scmp.lt.s32.totalorder %s148, 1
        %s152 = scalar_select %p151, %s148, 1
        %s153 = smul.addr %s150, 2
        %s154 = sadd.s32 %s152, %s153
        %s155 = smul.addr %s154, 4
        %s156 = scalar_lea.vmem %s0, %s155
        %s157 = smul.u32 2, %s18
      $region28: #{sse_block.1} parent=23 // pred_fallthru
        _
    $region24: #{sse_block.1} parent=5 // pred_fallthru
      _
    %p158 = scmp.le.s32.totalorder 1, %s10
    %p159 = scmp.lt.s32.totalorder %s10, 3
    %p160 = pnand %p158, %p159
    %p161 = pneg %p160
    // Predicated region
    $region29: #{sse_block.1} parent=5 // pred_check
      _
    $region30: #{sse_block.1} parent=5 // pred_check_branch
      %163 = sbr.rel (%p160) target = $region32
    $region31: #{sse_block.1} parent=5 // pred_region
      %s164 = ssub.s32 %s10, 1
      %s165 = smul.u32 2, %s20
      %p166 = scmp.lt.s32.totalorder %s19, 1
      %s167 = scalar_select %p166, %s19, 1
      %p168 = scmp.lt.s32.totalorder %s165, 1
      %s169 = scalar_select %p168, %s165, 1
      %s170 = smul.addr %s167, 2
      %s171 = sadd.s32 %s169, %s170
      %s172 = smul.addr %s171, 4
      %s173 = scalar_lea.vmem %s0, %s172
      %p174 = pneg %p50
      %p175 = pneg %p47
      %p176 = pneg %p71
      %p177 = pneg %p68
      %p178 = pneg %p92
      %p179 = pneg %p89
      %p180 = pneg %p120
      %p181 = pneg %p117
      %s182 = smul.u32 2, %s20
      %p183 = scmp.lt.s32.totalorder %s19, 1
      %s184 = scalar_select %p183, %s19, 1
      %p185 = scmp.lt.s32.totalorder %s182, 1
      %s186 = scalar_select %p185, %s182, 1
      %s187 = smul.addr %s184, 2
      %s188 = sadd.s32 %s186, %s187
      %s189 = smul.addr %s188, 4
      %s190 = scalar_lea.vmem %s3, %s189
      %s191 = smul.u32 2, %s20
      %p192 = scmp.lt.s32.totalorder %s19, 1
      %s193 = scalar_select %p192, %s19, 1
      %p194 = scmp.lt.s32.totalorder %s191, 1
      %s195 = scalar_select %p194, %s191, 1
      %s196 = smul.addr %s193, 2
      %s197 = sadd.s32 %s195, %s196
      %s198 = smul.addr %s197, 4
      %s199 = scalar_lea.vmem %s0, %s198
      %s200 = smul.u32 2, %s20
      %s201 = smul.u32 2, %s20
      %p202 = scmp.lt.s32.totalorder %s19, 1
      %s203 = scalar_select %p202, %s19, 1
      %p204 = scmp.lt.s32.totalorder %s201, 1
      %s205 = scalar_select %p204, %s201, 1
      %s206 = smul.addr %s203, 2
      %s207 = sadd.s32 %s205, %s206
      %s208 = smul.addr %s207, 4
      %s209 = scalar_lea.vmem %s3, %s208
      %s210 = smul.u32 2, %s20
      %v211 = vld [vmem:[%s199] sm:$0xff]
      %v212 = vld [vmem:[%s1] sm:$0xf]
      %214 = vset.pattern.permute.xlu0 0
      %215 = vperm.xlu0 %214, %v212
      %v216 = vpop.permute.xlu0 %215
      %v218 = vunpack.c.l.s4 839922192
      %v219 = vunpack.c.0.s8 %v218
      %v220 = vlaneseq
      %v221 = vshrl.u32 %v220, 7
      %v222 = vsub.s32 %v219, %v221
      %v223 = vrot.slane %v216, %v222
      %v225 = vmul.f32 %v211, %v223
      %v227 = vcombine.high %v225, %v225
      %vm229 = vcmask 1043456
      %v230 = vsel %vm229, %v225, 0.0
      %v231 = vrot.slane %v230, 4
      %v232 = vadd.f32 %v230, %v231
      %v233 = vrot.slane %v232, 2
      %v234 = vadd.f32 %v232, %v233
      %v235 = vrot.slane %v234, 1
      %v236 = vadd.f32 %v234, %v235
      %v237 = vsel %vm229, %v227, 0.0
      %v238 = vrot.slane %v237, 4
      %v239 = vadd.f32 %v237, %v238
      %v240 = vrot.slane %v239, 2
      %v241 = vadd.f32 %v239, %v240
      %v242 = vrot.slane %v241, 1
      %v243 = vadd.f32 %v241, %v242
      %s244 = sld [smem:[#allocation2]]
      %v245 = vstv %s244
      %v246 = vadd.f32 %v236, %v245
      %v247 = vadd.f32 %v243, %v245
      %v248 = vxor.u32 %v246, 2147483648
      %v249 = vxor.u32 %v247, 2147483648
      %v250 = vmul.f32 %v248, 1.442695
      %v251 = vpow.pop %v250
      %v252 = vmul.f32 %v249, 1.442695
      %v253 = vpow.pop %v252
      %v254 = vadd.f32 %v251, 1.0
      %v255 = vadd.f32 %v253, 1.0
      %v256 = vrcp.pop %v254
      %v257 = vmul.f32 1.0, %v256
      %v258 = vrcp.pop %v255
      %v259 = vmul.f32 1.0, %v258
      %v262 = vcombine.low %v257, %v259
      %v264 = vmul.f32 %v211, %v262
      %265 = vst [vmem:[%s209] sm:$0xff] %v264
      %s266 = smul.u32 2, %s20
      %p267 = scmp.lt.s32.totalorder %s19, 1
      %s268 = scalar_select %p267, %s19, 1
      %p269 = scmp.lt.s32.totalorder %s266, 1
      %s270 = scalar_select %p269, %s266, 1
      %s271 = smul.addr %s268, 2
      %s272 = sadd.s32 %s270, %s271
      %s273 = smul.addr %s272, 4
      %s274 = scalar_lea.vmem %s3, %s273
      // Predicated region
      $region33: #{sse_block.1} parent=31 // pred_check
        %p275 = pneg %p117
      $region34: #{sse_block.1} parent=31 // pred_check_branch
        %277 = sbr.rel (%p275) target = $region36
      $region35: #{sse_block.1} parent=31 // pred_region
        %s278 = smul.u32 2, %s20
      $region36: #{sse_block.1} parent=31 // pred_fallthru
        _
    $region32: #{sse_block.1} parent=5 // pred_fallthru
      _
    %p279 = scmp.le.s32.totalorder 2, %s10
    // Predicated region
    $region37: #{sse_block.1} parent=5 // pred_check
      %p280 = pneg %p279
    $region38: #{sse_block.1} parent=5 // pred_check_branch
      %282 = sbr.rel (%p280) target = $region40
    $region39: #{sse_block.1} parent=5 // pred_region
      %s283 = ssub.s32 %s10, 2
      // Predicated region
      $region41: #{sse_block.1} parent=39 // pred_check
        %p284 = pneg %p123
      $region42: #{sse_block.1} parent=39 // pred_check_branch
        %286 = sbr.rel (%p284) target = $region44
      $region43: #{sse_block.1} parent=39 // pred_region
        %s287 = smul.u32 2, %s22
        %p288 = scmp.lt.s32.totalorder %s21, 1
        %s289 = scalar_select %p288, %s21, 1
        %p290 = scmp.lt.s32.totalorder %s287, 1
        %s291 = scalar_select %p290, %s287, 1
        %s292 = smul.addr %s289, 2
        %s293 = sadd.s32 %s291, %s292
        %s294 = smul.addr %s293, 4
        %s295 = scalar_lea.vmem %s3, %s294
      $region44: #{sse_block.1} parent=39 // pred_fallthru
        _
    $region40: #{sse_block.1} parent=5 // pred_fallthru
      _
  $region6: #{sse_block.1} parent=0 // loop_footer
    %s14 = sadd.s32 1, %s10
  $region7: #{sse_block.1} parent=0 // loop_footer_branch
    %9 = sbr.rel target = $region3
  $region8: #{sse_block.1} parent=0 // loop_exit
    _

</llo_original>
